<compile_context>
chip_gen: v5e
topology: v5e:2x2
jax: 0.10.0
libtpu: 0.0.40
codegen_flags: <defaults>
</compile_context>

<pallas_src>
import jax
import jax.numpy as jnp
import numpy as np
from jax.experimental import pallas as pl
from jax.experimental.pallas import tpu as pltpu

# ----------------------------- model dims -----------------------------------
INPUT_DIM = 384
HIDDEN_DIM = 128
MEANING_DIM = 92
WORDTYPE_DIM = 2
PRON_DIM = 50
WORD_EMB_DIM = 32
NUM_WORDS = 100

HEAD_DIM = MEANING_DIM + WORDTYPE_DIM + PRON_DIM + 1   # 145 real head columns
HEAD_PAD = 256                                          # lane-dense (2 vregs)

# packed-weight row offsets (all multiples of 16 -> bf16 sublane-tile aligned)
W1_END = INPUT_DIM                    # 384
W2_END = W1_END + HIDDEN_DIM          # 512
WC_END = W2_END + HIDDEN_DIM          # 640

# packed-bias lane offsets (all multiples of 128 -> lane-tile aligned)
B1_END = HIDDEN_DIM                   # 128
B2_END = 2 * HIDDEN_DIM               # 256
BC_END = 3 * HIDDEN_DIM               # 384
BH_END = BC_END + HEAD_PAD            # 640


# ----------------------------- Pallas kernel --------------------------------
def heteronym_kernel(idx_ref, x_ref, emb_ref, wenc_ref, whead_ref, bias_ref,
                     out_ref):
    B = x_ref.shape[0]

    # in-kernel f32 -> bf16 cast of the activations (review item 1)
    x = x_ref[...].astype(jnp.bfloat16)             # (B, 384)

    # static slices of the packed buffers (tile-aligned -> pure views)
    b1 = bias_ref[:, 0:B1_END]
    b2 = bias_ref[:, B1_END:B2_END]
    bc = bias_ref[:, B2_END:BC_END]
    bh = bias_ref[:, BC_END:BH_END]                 # (1, 256) padded head bias

    # encoder: Linear -> ReLU -> (Dropout=id) -> Linear -> ReLU -> (Dropout=id)
    h1 = jnp.dot(x, wenc_ref[0:W1_END, :],
                 preferred_element_type=jnp.float32) + b1
    h1 = jnp.maximum(h1, 0.0).astype(jnp.bfloat16)

    h2 = jnp.dot(h1, wenc_ref[W1_END:W2_END, :],
                 preferred_element_type=jnp.float32) + b2
    h2 = jnp.maximum(h2, 0.0).astype(jnp.bfloat16)

    # in-kernel embedding gather (review item 2): word_idx lives in SMEM,
    # emb_proj = embedding @ wc_emb is precomputed (100, 128) f32 in VMEM, so
    # the combined_layer's word-embedding half is just a row-gather + add.
    rows = [emb_ref[pl.ds(idx_ref[i], 1), :] for i in range(B)]
    wproj = jnp.concatenate(rows, axis=0)           # (B, 128) f32

    comb = (jnp.dot(h2, wenc_ref[W2_END:WC_END, :],
                    preferred_element_type=jnp.float32)
            + wproj + bc)
    hidden = jnp.maximum(comb, 0.0).astype(jnp.bfloat16)   # dropout = id (eval)

    # all four heads as one lane-dense matmul -> (B, 256) raw logits
    head = jnp.dot(hidden, whead_ref[...],
                   preferred_element_type=jnp.float32) + bh

    # in-kernel sigmoid on the activation-time column (review item 3): exp goes
    # to the EUP slot, effectively free; other columns pass through unchanged.
    col = jax.lax.broadcasted_iota(jnp.int32, head.shape, 1)
    out_ref[...] = jnp.where(col == HEAD_DIM - 1, jax.nn.sigmoid(head), head)


# ----------------------------- jitted wrapper --------------------------------
@jax.jit
def heteronym_forward(x, word_idx, packed):
    """x: (B, 384) f32, word_idx: (B,) int32. Returns the 4 module outputs."""
    B = x.shape[0]

    vmem = pl.BlockSpec(memory_space=pltpu.MemorySpace.VMEM)
    smem = pl.BlockSpec(memory_space=pltpu.MemorySpace.SMEM)

    # TODO(synk): for B >= ~256 add a parallel batch grid (x/out blocks of
    # 128 rows, weights resident via index_map lambda i: (0, 0)) so v7x's
    # second TensorCore is used; at B=8 a grid would be pure overhead.
    fused = pl.pallas_call(
        heteronym_kernel,
        out_shape=jax.ShapeDtypeStruct((B, HEAD_PAD), jnp.float32),
        in_specs=[smem, vmem, vmem, vmem, vmem, vmem],
        out_specs=vmem,
    )(word_idx, x, packed["emb_proj"],
      packed["w_enc"], packed["w_head"], packed["bias"])

    meaning = fused[:, :MEANING_DIM]
    wordtype = fused[:, MEANING_DIM:MEANING_DIM + WORDTYPE_DIM]
    pron = fused[:, MEANING_DIM + WORDTYPE_DIM:HEAD_DIM - 1]
    act = fused[:, HEAD_DIM - 1:HEAD_DIM]           # sigmoid already applied
    return meaning, wordtype, pron, act


# ----------------------- deterministic parameter init -----------------------
def init_params(key):
    ks = jax.random.split(key, 20)

    def linear(kw, kb, fan_in, fan_out):
        # PyTorch-style uniform(-1/sqrt(fan_in), 1/sqrt(fan_in)); stored as
        # (in, out) so the math is x @ W + b.
        bound = 1.0 / np.sqrt(fan_in)
        w = jax.random.uniform(kw, (fan_in, fan_out), jnp.float32, -bound, bound)
        b = jax.random.uniform(kb, (1, fan_out), jnp.float32, -bound, bound)
        return w, b

    embedding = jax.random.normal(ks[0], (NUM_WORDS, WORD_EMB_DIM), jnp.float32)

    w1, b1 = linear(ks[1], ks[2], INPUT_DIM, HIDDEN_DIM)
    w2, b2 = linear(ks[3], ks[4], HIDDEN_DIM, HIDDEN_DIM)

    # combined_layer: in = HIDDEN_DIM + WORD_EMB_DIM = 160; split the weight.
    wc_full, bc = linear(ks[5], ks[6], HIDDEN_DIM + WORD_EMB_DIM, HIDDEN_DIM)
    wc_enc = wc_full[:HIDDEN_DIM, :]
    wc_emb = wc_full[HIDDEN_DIM:, :]

    wm, bm = linear(ks[7], ks[8], HIDDEN_DIM, MEANING_DIM)
    wt, bt = linear(ks[9], ks[10], HIDDEN_DIM, WORDTYPE_DIM)
    wp, bp = linear(ks[11], ks[12], HIDDEN_DIM, PRON_DIM)
    wa, ba = linear(ks[13], ks[14], HIDDEN_DIM, 1)

    return dict(
        embedding=embedding,
        w1=w1, b1=b1, w2=w2, b2=b2,
        wc_enc=wc_enc, wc_emb=wc_emb, bc=bc,
        wm=wm, bm=bm, wt=wt, bt=bt, wp=wp, bp=bp, wa=wa, ba=ba,
    )


def pack_params(p):
    """Pack the per-layer parameters into the 3 kernel buffers + gather table."""
    w_enc = jnp.concatenate([p["w1"], p["w2"], p["wc_enc"]], axis=0)       # (640,128)
    w_enc = w_enc.astype(jnp.bfloat16)

    w_head = jnp.concatenate([p["wm"], p["wt"], p["wp"], p["wa"]], axis=1)  # (128,145)
    w_head = jnp.pad(w_head, ((0, 0), (0, HEAD_PAD - HEAD_DIM)))            # (128,256)
    w_head = w_head.astype(jnp.bfloat16)

    b_head = jnp.concatenate([p["bm"], p["bt"], p["bp"], p["ba"]], axis=1)  # (1,145)
    b_head = jnp.pad(b_head, ((0, 0), (0, HEAD_PAD - HEAD_DIM)))            # (1,256)
    bias = jnp.concatenate([p["b1"], p["b2"], p["bc"], b_head], axis=1)     # (1,640) f32

    # Fold the word-embedding half of combined_layer: (100,32)@(32,128)->(100,128)
    emb_proj = p["embedding"] @ p["wc_emb"]

    return dict(w_enc=w_enc, w_head=w_head, bias=bias, emb_proj=emb_proj)


# ----------------------------- pure-JAX reference ----------------------------
def reference_forward(x, word_idx, p):
    wemb = p["embedding"][word_idx]
    h1 = jnp.maximum(x @ p["w1"] + p["b1"], 0.0)
    h2 = jnp.maximum(h1 @ p["w2"] + p["b2"], 0.0)
    comb = jnp.concatenate([h2, wemb], axis=1)
    wc_full = jnp.concatenate([p["wc_enc"], p["wc_emb"]], axis=0)
    hidden = jnp.maximum(comb @ wc_full + p["bc"], 0.0)
    return (
        hidden @ p["wm"] + p["bm"],
        hidden @ p["wt"] + p["bt"],
        hidden @ p["wp"] + p["bp"],
        jax.nn.sigmoid(hidden @ p["wa"] + p["ba"]),
    )


if __name__ == "__main__":
    key = jax.random.PRNGKey(0)
    k_params, k_x, k_idx = jax.random.split(key, 3)

    B = 8
    params = init_params(k_params)
    packed = pack_params(params)
    x = jax.random.normal(k_x, (B, INPUT_DIM), jnp.float32)
    word_idx = jax.random.randint(k_idx, (B,), 0, NUM_WORDS, jnp.int32)

    outs = heteronym_forward(x, word_idx, packed)
    outs = jax.block_until_ready(outs)

    # Reference is full f32; kernel uses bf16 MXU operands with f32 accumulation,
    # so compare with bf16-appropriate tolerances.
    refs = reference_forward(x, word_idx, params)
    for o, r in zip(outs, refs):
        assert o.shape == r.shape, (o.shape, r.shape)
        np.testing.assert_allclose(np.asarray(o), np.asarray(r), rtol=5e-2, atol=5e-2)

    print("KERNEL_OK")
</pallas_src>

<mosaic_0001>
module attributes {stable_mosaic.version = 11 : i64} {
  func.func @heteronym_kernel(%arg0: memref<8xi32, #tpu.memory_space<smem>>, %arg1: memref<8x384xf32, #tpu.memory_space<vmem>>, %arg2: memref<100x128xf32, #tpu.memory_space<vmem>>, %arg3: memref<640x128xbf16, #tpu.memory_space<vmem>>, %arg4: memref<128x256xbf16, #tpu.memory_space<vmem>>, %arg5: memref<1x640xf32, #tpu.memory_space<vmem>>, %arg6: memref<8x256xf32, #tpu.memory_space<vmem>>) attributes {dimension_semantics = [], scalar_prefetch = 0 : i64, scratch_operands = 0 : i64, tpu.core_type = #tpu.core_type<tc>} {
    %c0 = arith.constant 0 : index
    %c0_0 = arith.constant 0 : index
    %0 = vector.load %arg1[%c0, %c0_0] : memref<8x384xf32, #tpu.memory_space<vmem>>, vector<8x384xf32>
    %1 = arith.truncf %0 : vector<8x384xf32> to vector<8x384xbf16>
    %c0_1 = arith.constant 0 : index
    %c0_2 = arith.constant 0 : index
    %2 = vector.load %arg5[%c0_1, %c0_2] : memref<1x640xf32, #tpu.memory_space<vmem>>, vector<1x128xf32>
    %c0_3 = arith.constant 0 : index
    %c128 = arith.constant 128 : index
    %3 = vector.load %arg5[%c0_3, %c128] : memref<1x640xf32, #tpu.memory_space<vmem>>, vector<1x128xf32>
    %c0_4 = arith.constant 0 : index
    %c256 = arith.constant 256 : index
    %4 = vector.load %arg5[%c0_4, %c256] : memref<1x640xf32, #tpu.memory_space<vmem>>, vector<1x128xf32>
    %c0_5 = arith.constant 0 : index
    %c384 = arith.constant 384 : index
    %5 = vector.load %arg5[%c0_5, %c384] : memref<1x640xf32, #tpu.memory_space<vmem>>, vector<1x256xf32>
    %c0_6 = arith.constant 0 : index
    %c0_7 = arith.constant 0 : index
    %6 = vector.load %arg3[%c0_6, %c0_7] : memref<640x128xbf16, #tpu.memory_space<vmem>>, vector<384x128xbf16>
    %cst = arith.constant dense<0.000000e+00> : vector<8x128xf32>
    %7 = tpu.matmul %1, %6, %cst {dimension_numbers = #tpu.dot_dimension_numbers<[1], [0], [0], [1], [0, 0, 1, 1], [], []>} : vector<8x384xbf16>, vector<384x128xbf16>, vector<8x128xf32> -> vector<8x128xf32>
    %8 = vector.broadcast %2 : vector<1x128xf32> to vector<8x128xf32>
    %9 = arith.addf %7, %8 : vector<8x128xf32>
    %cst_8 = arith.constant 0.000000e+00 : f32
    %10 = vector.broadcast %cst_8 : f32 to vector<8x128xf32>
    %11 = arith.maximumf %9, %10 : vector<8x128xf32>
    %12 = arith.truncf %11 : vector<8x128xf32> to vector<8x128xbf16>
    %c384_9 = arith.constant 384 : index
    %c0_10 = arith.constant 0 : index
    %13 = vector.load %arg3[%c384_9, %c0_10] : memref<640x128xbf16, #tpu.memory_space<vmem>>, vector<128x128xbf16>
    %cst_11 = arith.constant dense<0.000000e+00> : vector<8x128xf32>
    %14 = tpu.matmul %12, %13, %cst_11 {dimension_numbers = #tpu.dot_dimension_numbers<[1], [0], [0], [1], [0, 0, 1, 1], [], []>} : vector<8x128xbf16>, vector<128x128xbf16>, vector<8x128xf32> -> vector<8x128xf32>
    %15 = vector.broadcast %3 : vector<1x128xf32> to vector<8x128xf32>
    %16 = arith.addf %14, %15 : vector<8x128xf32>
    %cst_12 = arith.constant 0.000000e+00 : f32
    %17 = vector.broadcast %cst_12 : f32 to vector<8x128xf32>
    %18 = arith.maximumf %16, %17 : vector<8x128xf32>
    %19 = arith.truncf %18 : vector<8x128xf32> to vector<8x128xbf16>
    %c0_13 = arith.constant 0 : index
    %20 = memref.load %arg0[%c0_13] : memref<8xi32, #tpu.memory_space<smem>>
    %21 = arith.index_cast %20 : i32 to index
    %c0_14 = arith.constant 0 : index
    %22 = vector.load %arg2[%21, %c0_14] : memref<100x128xf32, #tpu.memory_space<vmem>>, vector<1x128xf32>
    %c1 = arith.constant 1 : index
    %23 = memref.load %arg0[%c1] : memref<8xi32, #tpu.memory_space<smem>>
    %24 = arith.index_cast %23 : i32 to index
    %c0_15 = arith.constant 0 : index
    %25 = vector.load %arg2[%24, %c0_15] : memref<100x128xf32, #tpu.memory_space<vmem>>, vector<1x128xf32>
    %c2 = arith.constant 2 : index
    %26 = memref.load %arg0[%c2] : memref<8xi32, #tpu.memory_space<smem>>
    %27 = arith.index_cast %26 : i32 to index
    %c0_16 = arith.constant 0 : index
    %28 = vector.load %arg2[%27, %c0_16] : memref<100x128xf32, #tpu.memory_space<vmem>>, vector<1x128xf32>
    %c3 = arith.constant 3 : index
    %29 = memref.load %arg0[%c3] : memref<8xi32, #tpu.memory_space<smem>>
    %30 = arith.index_cast %29 : i32 to index
    %c0_17 = arith.constant 0 : index
    %31 = vector.load %arg2[%30, %c0_17] : memref<100x128xf32, #tpu.memory_space<vmem>>, vector<1x128xf32>
    %c4 = arith.constant 4 : index
    %32 = memref.load %arg0[%c4] : memref<8xi32, #tpu.memory_space<smem>>
    %33 = arith.index_cast %32 : i32 to index
    %c0_18 = arith.constant 0 : index
    %34 = vector.load %arg2[%33, %c0_18] : memref<100x128xf32, #tpu.memory_space<vmem>>, vector<1x128xf32>
    %c5 = arith.constant 5 : index
    %35 = memref.load %arg0[%c5] : memref<8xi32, #tpu.memory_space<smem>>
    %36 = arith.index_cast %35 : i32 to index
    %c0_19 = arith.constant 0 : index
    %37 = vector.load %arg2[%36, %c0_19] : memref<100x128xf32, #tpu.memory_space<vmem>>, vector<1x128xf32>
    %c6 = arith.constant 6 : index
    %38 = memref.load %arg0[%c6] : memref<8xi32, #tpu.memory_space<smem>>
    %39 = arith.index_cast %38 : i32 to index
    %c0_20 = arith.constant 0 : index
    %40 = vector.load %arg2[%39, %c0_20] : memref<100x128xf32, #tpu.memory_space<vmem>>, vector<1x128xf32>
    %c7 = arith.constant 7 : index
    %41 = memref.load %arg0[%c7] : memref<8xi32, #tpu.memory_space<smem>>
    %42 = arith.index_cast %41 : i32 to index
    %c0_21 = arith.constant 0 : index
    %43 = vector.load %arg2[%42, %c0_21] : memref<100x128xf32, #tpu.memory_space<vmem>>, vector<1x128xf32>
    %44 = tpu.concatenate %22, %25, %28, %31, %34, %37, %40, %43 in 0 : vector<1x128xf32>, vector<1x128xf32>, vector<1x128xf32>, vector<1x128xf32>, vector<1x128xf32>, vector<1x128xf32>, vector<1x128xf32>, vector<1x128xf32> -> vector<8x128xf32>
    %c512 = arith.constant 512 : index
    %c0_22 = arith.constant 0 : index
    %45 = vector.load %arg3[%c512, %c0_22] : memref<640x128xbf16, #tpu.memory_space<vmem>>, vector<128x128xbf16>
    %cst_23 = arith.constant dense<0.000000e+00> : vector<8x128xf32>
    %46 = tpu.matmul %19, %45, %cst_23 {dimension_numbers = #tpu.dot_dimension_numbers<[1], [0], [0], [1], [0, 0, 1, 1], [], []>} : vector<8x128xbf16>, vector<128x128xbf16>, vector<8x128xf32> -> vector<8x128xf32>
    %47 = arith.addf %46, %44 : vector<8x128xf32>
    %48 = vector.broadcast %4 : vector<1x128xf32> to vector<8x128xf32>
    %49 = arith.addf %47, %48 : vector<8x128xf32>
    %cst_24 = arith.constant 0.000000e+00 : f32
    %50 = vector.broadcast %cst_24 : f32 to vector<8x128xf32>
    %51 = arith.maximumf %49, %50 : vector<8x128xf32>
    %52 = arith.truncf %51 : vector<8x128xf32> to vector<8x128xbf16>
    %c0_25 = arith.constant 0 : index
    %c0_26 = arith.constant 0 : index
    %53 = vector.load %arg4[%c0_25, %c0_26] : memref<128x256xbf16, #tpu.memory_space<vmem>>, vector<128x256xbf16>
    %cst_27 = arith.constant dense<0.000000e+00> : vector<8x256xf32>
    %54 = tpu.matmul %52, %53, %cst_27 {dimension_numbers = #tpu.dot_dimension_numbers<[1], [0], [0], [1], [0, 0, 1, 1], [], []>} : vector<8x128xbf16>, vector<128x256xbf16>, vector<8x256xf32> -> vector<8x256xf32>
    %55 = vector.broadcast %5 : vector<1x256xf32> to vector<8x256xf32>
    %56 = arith.addf %54, %55 : vector<8x256xf32>
    %57 = tpu.iota {dimensions = array<i32: 1>} : vector<8x256xi32>
    %c144_i32 = arith.constant 144 : i32
    %58 = vector.broadcast %c144_i32 : i32 to vector<8x256xi32>
    %59 = arith.cmpi eq, %57, %58 : vector<8x256xi32>
    %60 = arith.negf %56 : vector<8x256xf32>
    %61 = math.exp %60 : vector<8x256xf32>
    %cst_28 = arith.constant 1.000000e+00 : f32
    %62 = vector.broadcast %cst_28 : f32 to vector<8x256xf32>
    %63 = arith.addf %62, %61 : vector<8x256xf32>
    %64 = arith.divf %62, %63 : vector<8x256xf32>
    %65 = arith.select %59, %64, %56 : vector<8x256xi1>, vector<8x256xf32>
    %c0_29 = arith.constant 0 : index
    %c0_30 = arith.constant 0 : index
    %66 = vector.load %arg6[%c0_29, %c0_30] : memref<8x256xf32, #tpu.memory_space<vmem>>, vector<8x256xf32>
    tpu.vector_store %arg6[%c0_29, %c0_30], %65 {strides = array<i32>} : memref<8x256xf32, #tpu.memory_space<vmem>>, vector<8x256xf32>,
    return
  }
}

</mosaic_0001>

<llo_original>
// kernel: heteronym_forward.1
$region0: #{heteronym_forward.1}
  #allocation0 [shape = 'u32[]', space=smem, size = 0x4, offset = 0x4, fixed_abs, tag = 'smem constant byte address 0x4 - core index']
  #allocation1 [shape = 'u32[72,128]{1,0:T(1,128)}', space=vmem, size = 0x9000, scoped, tag = 'internal scratch']
  %s0 = inlined_call_operand.hbm [shape: s32[8], index: 0, kind: input, shape index: {}]
  %s1 = inlined_call_operand.hbm [shape: f32[8,384], index: 1, kind: input, shape index: {}]
  %s2 = inlined_call_operand.hbm [shape: f32[100,128], index: 2, kind: input, shape index: {}]
  %s3 = inlined_call_operand.hbm [shape: bf16[640,128], index: 3, kind: input, shape index: {}]
  %s4 = inlined_call_operand.hbm [shape: bf16[128,256], index: 4, kind: input, shape index: {}]
  %s5 = inlined_call_operand.hbm [shape: f32[1,640], index: 5, kind: input, shape index: {}]
  %s6 = inlined_call_operand.vmem [shape: f32[8,256], index: 6, kind: output, shape index: {}]
  %s7 = sld [smem:[#allocation0]]
  $region58: #{heteronym_forward.1} parent=0
    _
  %s9 = ssub.s32 1, %s7
  %s10 = scalar_select 0, %s9, %s7
  $region1: #{heteronym_forward.1} parent=0
    #allocation2 [shape = 'u8[512]{0}', space=smem, size = 0x200, scoped, tag = 'input window, operand 0, single buffered']
    #allocation3 [shape = 's32[1]{0}', space=sflag, size = 0x4, scoped, tag = 'scoped memory for heteronym_forward.1']
    #allocation4 [shape = 's32[1]{0}', space=sflag, size = 0x4, scoped, tag = 'scoped memory for heteronym_forward.1']
    #allocation5 [shape = 'u8[12288]{0}', space=vmem, size = 0x3000, scoped, tag = 'input window, operand 1, single buffered']
    #allocation6 [shape = 'u8[53248]{0}', space=vmem, size = 0xd000, scoped, tag = 'input window, operand 2, single buffered']
    #allocation7 [shape = 's32[1]{0}', space=sflag, size = 0x4, scoped, tag = 'scoped memory for heteronym_forward.1']
    #allocation8 [shape = 'u8[163840]{0}', space=vmem, size = 0x28000, scoped, tag = 'input window, operand 3, single buffered']
    #allocation9 [shape = 'u8[65536]{0}', space=vmem, size = 0x10000, scoped, tag = 'input window, operand 4, single buffered']
    #allocation10 [shape = 's32[1]{0}', space=sflag, size = 0x4, scoped, tag = 'scoped memory for heteronym_forward.1']
    #allocation11 [shape = 'u8[2560]{0}', space=vmem, size = 0xc00, scoped, tag = 'input window, operand 5, single buffered']
    %11 = vsyncpa [#allocation4], 0
    %12 = vsyncpa [#allocation3], 0
    %13 = vsyncpa [#allocation7], 0
    %14 = vsyncpa [#allocation10], 0
    // Predicated region
    $region2: #{heteronym_forward.1} parent=1 // pred_check
      _
    $region3: #{heteronym_forward.1} parent=1 // pred_check_branch
      %16 = sbr.rel (0) target = $region5
    $region4: #{heteronym_forward.1} parent=1 // pred_region
      %18 = vsyncadd [#allocation4], 0
      %s20 = sshll.u32 %s0, 4
      %s21 = int_to_ptr.hbm [resolvable:$true] %s20
      %23 = dma.hbm_to_smem %s21, 16, [#allocation2], [#allocation4]
    $region5: #{heteronym_forward.1} parent=1 // pred_fallthru
      _
    // Predicated region
    $region6: #{heteronym_forward.1} parent=1 // pred_check
      _
    $region7: #{heteronym_forward.1} parent=1 // pred_check_branch
      %25 = sbr.rel (0) target = $region9
    $region8: #{heteronym_forward.1} parent=1 // pred_region
      %27 = vsyncadd [#allocation3], 0
      %s29 = sshll.u32 %s1, 4
      %s30 = int_to_ptr.hbm [resolvable:$true] %s29
      %s31 = sshll.u32 [#allocation5], 4
      %s32 = int_to_ptr.vmem [resolvable:$true] %s31
      %34 = dma.hbm_to_vmem [thread:$0]  %s30, 384, %s32, [#allocation3]
    $region9: #{heteronym_forward.1} parent=1 // pred_fallthru
      _
    // Predicated region
    $region10: #{heteronym_forward.1} parent=1 // pred_check
      _
    $region11: #{heteronym_forward.1} parent=1 // pred_check_branch
      %36 = sbr.rel (0) target = $region13
    $region12: #{heteronym_forward.1} parent=1 // pred_region
      %38 = vsyncadd [#allocation7], 0
      %s39 = sshll.u32 %s2, 4
      %s40 = int_to_ptr.hbm [resolvable:$true] %s39
      %s41 = sshll.u32 [#allocation6], 4
      %s42 = int_to_ptr.vmem [resolvable:$true] %s41
      %47 = dma.hbm_to_vmem [thread:$0]  %s40, 1664, %s42, [#allocation7], 128, 128, 8
    $region13: #{heteronym_forward.1} parent=1 // pred_fallthru
      _
    // Predicated region
    $region14: #{heteronym_forward.1} parent=1 // pred_check
      _
    $region15: #{heteronym_forward.1} parent=1 // pred_check_branch
      %49 = sbr.rel (0) target = $region17
    $region16: #{heteronym_forward.1} parent=1 // pred_region
      %51 = vsyncadd [#allocation7], 0
      %s52 = sshll.u32 %s3, 4
      %s53 = int_to_ptr.hbm [resolvable:$true] %s52
      %s54 = sshll.u32 [#allocation8], 4
      %s55 = int_to_ptr.vmem [resolvable:$true] %s54
      %60 = dma.hbm_to_vmem [thread:$0]  %s53, 5120, %s55, [#allocation7], 64, 64, 4
    $region17: #{heteronym_forward.1} parent=1 // pred_fallthru
      _
    // Predicated region
    $region18: #{heteronym_forward.1} parent=1 // pred_check
      _
    $region19: #{heteronym_forward.1} parent=1 // pred_check_branch
      %62 = sbr.rel (0) target = $region21
    $region20: #{heteronym_forward.1} parent=1 // pred_region
      %64 = vsyncadd [#allocation10], 0
      %s65 = sshll.u32 %s4, 4
      %s66 = int_to_ptr.hbm [resolvable:$true] %s65
      %s67 = sshll.u32 [#allocation9], 4
      %s68 = int_to_ptr.vmem [resolvable:$true] %s67
      %73 = dma.hbm_to_vmem [thread:$0]  %s66, 2048, %s68, [#allocation10], 128, 128, 8
    $region21: #{heteronym_forward.1} parent=1 // pred_fallthru
      _
    // Predicated region
    $region22: #{heteronym_forward.1} parent=1 // pred_check
      _
    $region23: #{heteronym_forward.1} parent=1 // pred_check_branch
      %75 = sbr.rel (0) target = $region25
    $region24: #{heteronym_forward.1} parent=1 // pred_region
      %77 = vsyncadd [#allocation10], 0
      %s79 = sshll.u32 %s5, 4
      %s80 = int_to_ptr.hbm [resolvable:$true] %s79
      %s81 = sshll.u32 [#allocation11], 4
      %s82 = int_to_ptr.vmem [resolvable:$true] %s81
      %84 = dma.hbm_to_vmem [thread:$0]  %s80, 80, %s82, [#allocation10]
    $region25: #{heteronym_forward.1} parent=1 // pred_fallthru
      _
    // Predicated region
    $region26: #{heteronym_forward.1} parent=1 // pred_check
      _
    $region27: #{heteronym_forward.1} parent=1 // pred_check_branch
      %86 = sbr.rel (0) target = $region29
    $region28: #{heteronym_forward.1} parent=1 // pred_region
      %88 = dma.done [#allocation4], 16
    $region29: #{heteronym_forward.1} parent=1 // pred_fallthru
      _
    // Predicated region
    $region30: #{heteronym_forward.1} parent=1 // pred_check
      _
    $region31: #{heteronym_forward.1} parent=1 // pred_check_branch
      %90 = sbr.rel (0) target = $region33
    $region32: #{heteronym_forward.1} parent=1 // pred_region
      %92 = dma.done [#allocation3], 384
    $region33: #{heteronym_forward.1} parent=1 // pred_fallthru
      _
    // Predicated region
    $region34: #{heteronym_forward.1} parent=1 // pred_check
      _
    $region35: #{heteronym_forward.1} parent=1 // pred_check_branch
      %94 = sbr.rel (0) target = $region37
    $region36: #{heteronym_forward.1} parent=1 // pred_region
      %96 = dma.done [#allocation7], 1664
    $region37: #{heteronym_forward.1} parent=1 // pred_fallthru
      _
    // Predicated region
    $region38: #{heteronym_forward.1} parent=1 // pred_check
      _
    $region39: #{heteronym_forward.1} parent=1 // pred_check_branch
      %98 = sbr.rel (0) target = $region41
    $region40: #{heteronym_forward.1} parent=1 // pred_region
      %100 = dma.done [#allocation7], 5120
    $region41: #{heteronym_forward.1} parent=1 // pred_fallthru
      _
    // Predicated region
    $region42: #{heteronym_forward.1} parent=1 // pred_check
      _
    $region43: #{heteronym_forward.1} parent=1 // pred_check_branch
      %102 = sbr.rel (0) target = $region45
    $region44: #{heteronym_forward.1} parent=1 // pred_region
      %104 = dma.done [#allocation10], 2048
    $region45: #{heteronym_forward.1} parent=1 // pred_fallthru
      _
    // Predicated region
    $region46: #{heteronym_forward.1} parent=1 // pred_check
      _
    $region47: #{heteronym_forward.1} parent=1 // pred_check_branch
      %106 = sbr.rel (0) target = $region49
    $region48: #{heteronym_forward.1} parent=1 // pred_region
      %108 = dma.done [#allocation10], 80
    $region49: #{heteronym_forward.1} parent=1 // pred_fallthru
      _
    %109 = sfence
    %v110 = vld [vmem:[#allocation5] sm:$0xff]
    %v111 = vld [vmem:[#allocation5 + $0x8] sm:$0xff]
    %v112 = vld [vmem:[#allocation5 + $0x10] sm:$0xff]
    %v113 = vpack.c.bf16 %v110, %v110
    %v114 = vpack.c.bf16 %v111, %v111
    %v115 = vpack.c.bf16 %v112, %v112
    %v116 = vld [vmem:[#allocation11] sm:$0x1]
    %v117 = vld [vmem:[#allocation11 + $0x1] sm:$0x1]
    %v118 = vld [vmem:[#allocation11 + $0x2] sm:$0x1]
    %v119 = vld [vmem:[#allocation11 + $0x3] sm:$0x3]
    %v120 = vld [vmem:[#allocation8] sm:$0xf]
    %v121 = vld [vmem:[#allocation8 + $0x4] sm:$0xf]
    %v122 = vld [vmem:[#allocation8 + $0x8] sm:$0xf]
    %v123 = vld [vmem:[#allocation8 + $0xc] sm:$0xf]
    %v124 = vld [vmem:[#allocation8 + $0x10] sm:$0xf]
    %v125 = vld [vmem:[#allocation8 + $0x14] sm:$0xf]
    %v126 = vld [vmem:[#allocation8 + $0x18] sm:$0xf]
    %v127 = vld [vmem:[#allocation8 + $0x1c] sm:$0xf]
    %v128 = vld [vmem:[#allocation8 + $0x20] sm:$0xf]
    %v129 = vld [vmem:[#allocation8 + $0x24] sm:$0xf]
    %v130 = vld [vmem:[#allocation8 + $0x28] sm:$0xf]
    %v131 = vld [vmem:[#allocation8 + $0x2c] sm:$0xf]
    %v132 = vld [vmem:[#allocation8 + $0x30] sm:$0xf]
    %v133 = vld [vmem:[#allocation8 + $0x34] sm:$0xf]
    %v134 = vld [vmem:[#allocation8 + $0x38] sm:$0xf]
    %v135 = vld [vmem:[#allocation8 + $0x3c] sm:$0xf]
    %v136 = vld [vmem:[#allocation8 + $0x40] sm:$0xf]
    %v137 = vld [vmem:[#allocation8 + $0x44] sm:$0xf]
    %v138 = vld [vmem:[#allocation8 + $0x48] sm:$0xf]
    %v139 = vld [vmem:[#allocation8 + $0x4c] sm:$0xf]
    %v140 = vld [vmem:[#allocation8 + $0x50] sm:$0xf]
    %v141 = vld [vmem:[#allocation8 + $0x54] sm:$0xf]
    %v142 = vld [vmem:[#allocation8 + $0x58] sm:$0xf]
    %v143 = vld [vmem:[#allocation8 + $0x5c] sm:$0xf]
    %v144 = vld [vmem:[#allocation8 + $0x60] sm:$0xf]
    %v145 = vld [vmem:[#allocation8 + $0x64] sm:$0xf]
    %v146 = vld [vmem:[#allocation8 + $0x68] sm:$0xf]
    %v147 = vld [vmem:[#allocation8 + $0x6c] sm:$0xf]
    %v148 = vld [vmem:[#allocation8 + $0x70] sm:$0xf]
    %v149 = vld [vmem:[#allocation8 + $0x74] sm:$0xf]
    %v150 = vld [vmem:[#allocation8 + $0x78] sm:$0xf]
    %v151 = vld [vmem:[#allocation8 + $0x7c] sm:$0xf]
    %v152 = vld [vmem:[#allocation8 + $0x80] sm:$0xf]
    %v153 = vld [vmem:[#allocation8 + $0x84] sm:$0xf]
    %v154 = vld [vmem:[#allocation8 + $0x88] sm:$0xf]
    %v155 = vld [vmem:[#allocation8 + $0x8c] sm:$0xf]
    %v156 = vld [vmem:[#allocation8 + $0x90] sm:$0xf]
    %v157 = vld [vmem:[#allocation8 + $0x94] sm:$0xf]
    %v158 = vld [vmem:[#allocation8 + $0x98] sm:$0xf]
    %v159 = vld [vmem:[#allocation8 + $0x9c] sm:$0xf]
    %v160 = vld [vmem:[#allocation8 + $0xa0] sm:$0xf]
    %v161 = vld [vmem:[#allocation8 + $0xa4] sm:$0xf]
    %v162 = vld [vmem:[#allocation8 + $0xa8] sm:$0xf]
    %v163 = vld [vmem:[#allocation8 + $0xac] sm:$0xf]
    %v164 = vld [vmem:[#allocation8 + $0xb0] sm:$0xf]
    %v165 = vld [vmem:[#allocation8 + $0xb4] sm:$0xf]
    %v166 = vld [vmem:[#allocation8 + $0xb8] sm:$0xf]
    %v167 = vld [vmem:[#allocation8 + $0xbc] sm:$0xf]
    %v169 = vperm.slane %v116, 0
    %v219 = vunpack.c.l.b16 %v120
    %v220 = vunpack.c.l.b16 %v121
    %v221 = vunpack.c.l.b16 %v122
    %v222 = vunpack.c.l.b16 %v123
    %v223 = vunpack.c.l.b16 %v124
    %v224 = vunpack.c.l.b16 %v125
    %v225 = vunpack.c.l.b16 %v126
    %v226 = vunpack.c.l.b16 %v127
    %v227 = vunpack.c.l.b16 %v128
    %v228 = vunpack.c.l.b16 %v129
    %v229 = vunpack.c.l.b16 %v130
    %v230 = vunpack.c.l.b16 %v131
    %v231 = vunpack.c.l.b16 %v132
    %v232 = vunpack.c.l.b16 %v133
    %v233 = vunpack.c.l.b16 %v134
    %v234 = vunpack.c.l.b16 %v135
    %v235 = vunpack.c.l.b16 %v136
    %v236 = vunpack.c.l.b16 %v137
    %v237 = vunpack.c.l.b16 %v138
    %v238 = vunpack.c.l.b16 %v139
    %v239 = vunpack.c.l.b16 %v140
    %v240 = vunpack.c.l.b16 %v141
    %v241 = vunpack.c.l.b16 %v142
    %v242 = vunpack.c.l.b16 %v143
    %v243 = vunpack.c.l.b16 %v144
    %v244 = vunpack.c.l.b16 %v145
    %v245 = vunpack.c.l.b16 %v146
    %v246 = vunpack.c.l.b16 %v147
    %v247 = vunpack.c.l.b16 %v148
    %v248 = vunpack.c.l.b16 %v149
    %v249 = vunpack.c.l.b16 %v150
    %v250 = vunpack.c.l.b16 %v151
    %v251 = vunpack.c.l.b16 %v152
    %v252 = vunpack.c.l.b16 %v153
    %v253 = vunpack.c.l.b16 %v154
    %v254 = vunpack.c.l.b16 %v155
    %v255 = vunpack.c.l.b16 %v156
    %v256 = vunpack.c.l.b16 %v157
    %v257 = vunpack.c.l.b16 %v158
    %v258 = vunpack.c.l.b16 %v159
    %v259 = vunpack.c.l.b16 %v160
    %v260 = vunpack.c.l.b16 %v161
    %v261 = vunpack.c.l.b16 %v162
    %v262 = vunpack.c.l.b16 %v163
    %v263 = vunpack.c.l.b16 %v164
    %v264 = vunpack.c.l.b16 %v165
    %v265 = vunpack.c.l.b16 %v166
    %v266 = vunpack.c.l.b16 %v167
    %v267 = vpack.c.b16 %v220, %v219
    %v268 = vpack.c.b16 %v222, %v221
    %v269 = vpack.c.b16 %v224, %v223
    %v270 = vpack.c.b16 %v226, %v225
    %v271 = vpack.c.b16 %v228, %v227
    %v272 = vpack.c.b16 %v230, %v229
    %v273 = vpack.c.b16 %v232, %v231
    %v274 = vpack.c.b16 %v234, %v233
    %v275 = vpack.c.b16 %v236, %v235
    %v276 = vpack.c.b16 %v238, %v237
    %v277 = vpack.c.b16 %v240, %v239
    %v278 = vpack.c.b16 %v242, %v241
    %v279 = vpack.c.b16 %v244, %v243
    %v280 = vpack.c.b16 %v246, %v245
    %v281 = vpack.c.b16 %v248, %v247
    %v282 = vpack.c.b16 %v250, %v249
    %v283 = vpack.c.b16 %v252, %v251
    %v284 = vpack.c.b16 %v254, %v253
    %v285 = vpack.c.b16 %v256, %v255
    %v286 = vpack.c.b16 %v258, %v257
    %v287 = vpack.c.b16 %v260, %v259
    %v288 = vpack.c.b16 %v262, %v261
    %v289 = vpack.c.b16 %v264, %v263
    %v290 = vpack.c.b16 %v266, %v265
    %315 = vmatpush.bf16.msra.mxu0 %v274
    %316 = vmatpush.bf16.msra.mxu0 %v273
    %317 = vmatpush.bf16.msra.mxu0 %v272
    %318 = vmatpush.bf16.msra.mxu0 %v271
    %319 = vmatpush.bf16.msra.mxu0 %v270
    %320 = vmatpush.bf16.msra.mxu0 %v269
    %321 = vmatpush.bf16.msra.mxu0 %v268
    %322 = vmatpush.bf16.msra.mxu0 %v267
    %323 = vmatmul.bf16.gmra.mxu0 %v113
    %v324 = vpop.f32.mrf.mxu0
    %v325 = vadd.f32 %v169, %v324
    %v326 = vpop.f32.mrf.mxu0
    %327 = vdwg.mxu0
    %328 = vmatpush.bf16.msra.mxu0 %v282
    %329 = vmatpush.bf16.msra.mxu0 %v281
    %330 = vmatpush.bf16.msra.mxu0 %v280
    %331 = vmatpush.bf16.msra.mxu0 %v279
    %332 = vmatpush.bf16.msra.mxu0 %v278
    %333 = vmatpush.bf16.msra.mxu0 %v277
    %334 = vmatpush.bf16.msra.mxu0 %v276
    %335 = vmatpush.bf16.msra.mxu0 %v275
    %336 = vmatmul.bf16.gmra.mxu0 %v114
    %v337 = vpop.f32.mrf.mxu0
    %v338 = vadd.f32 %v325, %v337
    %v339 = vpop.f32.mrf.mxu0
    %340 = vdwg.mxu0
    %341 = vmatpush.bf16.msra.mxu0 %v290
    %342 = vmatpush.bf16.msra.mxu0 %v289
    %343 = vmatpush.bf16.msra.mxu0 %v288
    %344 = vmatpush.bf16.msra.mxu0 %v287
    %345 = vmatpush.bf16.msra.mxu0 %v286
    %346 = vmatpush.bf16.msra.mxu0 %v285
    %347 = vmatpush.bf16.msra.mxu0 %v284
    %348 = vmatpush.bf16.msra.mxu0 %v283
    %349 = vmatmul.bf16.gmra.mxu0 %v115
    %v350 = vpop.f32.mrf.mxu0
    %v351 = vadd.f32 %v338, %v350
    %v352 = vpop.f32.mrf.mxu0
    %353 = vdwg.mxu0
    %v354 = vmax.f32 %v351, 0.0
    %v355 = vpack.c.bf16 %v354, %v354
    %v356 = vld [vmem:[#allocation8 + $0xc0] sm:$0xf]
    %v357 = vld [vmem:[#allocation8 + $0xc4] sm:$0xf]
    %v358 = vld [vmem:[#allocation8 + $0xc8] sm:$0xf]
    %v359 = vld [vmem:[#allocation8 + $0xcc] sm:$0xf]
    %v360 = vld [vmem:[#allocation8 + $0xd0] sm:$0xf]
    %v361 = vld [vmem:[#allocation8 + $0xd4] sm:$0xf]
    %v362 = vld [vmem:[#allocation8 + $0xd8] sm:$0xf]
    %v363 = vld [vmem:[#allocation8 + $0xdc] sm:$0xf]
    %v364 = vld [vmem:[#allocation8 + $0xe0] sm:$0xf]
    %v365 = vld [vmem:[#allocation8 + $0xe4] sm:$0xf]
    %v366 = vld [vmem:[#allocation8 + $0xe8] sm:$0xf]
    %v367 = vld [vmem:[#allocation8 + $0xec] sm:$0xf]
    %v368 = vld [vmem:[#allocation8 + $0xf0] sm:$0xf]
    %v369 = vld [vmem:[#allocation8 + $0xf4] sm:$0xf]
    %v370 = vld [vmem:[#allocation8 + $0xf8] sm:$0xf]
    %v371 = vld [vmem:[#allocation8 + $0xfc] sm:$0xf]
    %v373 = vperm.slane %v117, 0
    %v391 = vunpack.c.l.b16 %v356
    %v392 = vunpack.c.l.b16 %v357
    %v393 = vunpack.c.l.b16 %v358
    %v394 = vunpack.c.l.b16 %v359
    %v395 = vunpack.c.l.b16 %v360
    %v396 = vunpack.c.l.b16 %v361
    %v397 = vunpack.c.l.b16 %v362
    %v398 = vunpack.c.l.b16 %v363
    %v399 = vunpack.c.l.b16 %v364
    %v400 = vunpack.c.l.b16 %v365
    %v401 = vunpack.c.l.b16 %v366
    %v402 = vunpack.c.l.b16 %v367
    %v403 = vunpack.c.l.b16 %v368
    %v404 = vunpack.c.l.b16 %v369
    %v405 = vunpack.c.l.b16 %v370
    %v406 = vunpack.c.l.b16 %v371
    %v407 = vpack.c.b16 %v392, %v391
    %v408 = vpack.c.b16 %v394, %v393
    %v409 = vpack.c.b16 %v396, %v395
    %v410 = vpack.c.b16 %v398, %v397
    %v411 = vpack.c.b16 %v400, %v399
    %v412 = vpack.c.b16 %v402, %v401
    %v413 = vpack.c.b16 %v404, %v403
    %v414 = vpack.c.b16 %v406, %v405
    %423 = vmatpush.bf16.msra.mxu0 %v414
    %424 = vmatpush.bf16.msra.mxu0 %v413
    %425 = vmatpush.bf16.msra.mxu0 %v412
    %426 = vmatpush.bf16.msra.mxu0 %v411
    %427 = vmatpush.bf16.msra.mxu0 %v410
    %428 = vmatpush.bf16.msra.mxu0 %v409
    %429 = vmatpush.bf16.msra.mxu0 %v408
    %430 = vmatpush.bf16.msra.mxu0 %v407
    %431 = vmatmul.bf16.gmra.mxu0 %v355
    %v432 = vpop.f32.mrf.mxu0
    %v433 = vadd.f32 %v373, %v432
    %v434 = vpop.f32.mrf.mxu0
    %435 = vdwg.mxu0
    %v436 = vmax.f32 %v433, 0.0
    %v437 = vpack.c.bf16 %v436, %v436
    %s438 = sld [smem:[#allocation2]]
    %s439 = scalar_lea.vmem [#allocation6], %s438
    %v440 = vld [vmem:[%s439] sm:$0x1]
    %s441 = sld [smem:[#allocation2 + $0x1]]
    %s442 = scalar_lea.vmem [#allocation6], %s441
    %v443 = vld [vmem:[%s442] sm:$0x1]
    %s444 = sld [smem:[#allocation2 + $0x2]]
    %s445 = scalar_lea.vmem [#allocation6], %s444
    %v446 = vld [vmem:[%s445] sm:$0x1]
    %s447 = sld [smem:[#allocation2 + $0x3]]
    %s448 = scalar_lea.vmem [#allocation6], %s447
    %v449 = vld [vmem:[%s448] sm:$0x1]
    %s450 = sld [smem:[#allocation2 + $0x4]]
    %s451 = scalar_lea.vmem [#allocation6], %s450
    %v452 = vld [vmem:[%s451] sm:$0x1]
    %s453 = sld [smem:[#allocation2 + $0x5]]
    %s454 = scalar_lea.vmem [#allocation6], %s453
    %v455 = vld [vmem:[%s454] sm:$0x1]
    %s456 = sld [smem:[#allocation2 + $0x6]]
    %s457 = scalar_lea.vmem [#allocation6], %s456
    %v458 = vld [vmem:[%s457] sm:$0x1]
    %s459 = sld [smem:[#allocation2 + $0x7]]
    %s460 = scalar_lea.vmem [#allocation6], %s459
    %v461 = vld [vmem:[%s460] sm:$0x1]
    %v463 = vrot.slane %v443, 7
    %v466 = vrot.slane %v446, 6
    %v469 = vrot.slane %v449, 5
    %v472 = vrot.slane %v452, 4
    %v475 = vrot.slane %v455, 3
    %v478 = vrot.slane %v458, 2
    %v481 = vrot.slane %v461, 1
    %vm483 = vcmask 1040384
    %v484 = vsel %vm483, %v440, %v463
    %vm485 = vcmask 1041408
    %v486 = vsel %vm485, %v484, %v466
    %vm487 = vcmask 1042432
    %v488 = vsel %vm487, %v486, %v469
    %vm489 = vcmask 1043456
    %v490 = vsel %vm489, %v488, %v472
    %vm491 = vcmask 1044480
    %v492 = vsel %vm491, %v490, %v475
    %vm493 = vcmask 1045504
    %v494 = vsel %vm493, %v492, %v478
    %vm495 = vcmask 1046528
    %v496 = vsel %vm495, %v494, %v481
    %v497 = vld [vmem:[#allocation8 + $0x100] sm:$0xf]
    %v498 = vld [vmem:[#allocation8 + $0x104] sm:$0xf]
    %v499 = vld [vmem:[#allocation8 + $0x108] sm:$0xf]
    %v500 = vld [vmem:[#allocation8 + $0x10c] sm:$0xf]
    %v501 = vld [vmem:[#allocation8 + $0x110] sm:$0xf]
    %v502 = vld [vmem:[#allocation8 + $0x114] sm:$0xf]
    %v503 = vld [vmem:[#allocation8 + $0x118] sm:$0xf]
    %v504 = vld [vmem:[#allocation8 + $0x11c] sm:$0xf]
    %v505 = vld [vmem:[#allocation8 + $0x120] sm:$0xf]
    %v506 = vld [vmem:[#allocation8 + $0x124] sm:$0xf]
    %v507 = vld [vmem:[#allocation8 + $0x128] sm:$0xf]
    %v508 = vld [vmem:[#allocation8 + $0x12c] sm:$0xf]
    %v509 = vld [vmem:[#allocation8 + $0x130] sm:$0xf]
    %v510 = vld [vmem:[#allocation8 + $0x134] sm:$0xf]
    %v511 = vld [vmem:[#allocation8 + $0x138] sm:$0xf]
    %v512 = vld [vmem:[#allocation8 + $0x13c] sm:$0xf]
    %v529 = vunpack.c.l.b16 %v497
    %v530 = vunpack.c.l.b16 %v498
    %v531 = vunpack.c.l.b16 %v499
    %v532 = vunpack.c.l.b16 %v500
    %v533 = vunpack.c.l.b16 %v501
    %v534 = vunpack.c.l.b16 %v502
    %v535 = vunpack.c.l.b16 %v503
    %v536 = vunpack.c.l.b16 %v504
    %v537 = vunpack.c.l.b16 %v505
    %v538 = vunpack.c.l.b16 %v506
    %v539 = vunpack.c.l.b16 %v507
    %v540 = vunpack.c.l.b16 %v508
    %v541 = vunpack.c.l.b16 %v509
    %v542 = vunpack.c.l.b16 %v510
    %v543 = vunpack.c.l.b16 %v511
    %v544 = vunpack.c.l.b16 %v512
    %v545 = vpack.c.b16 %v530, %v529
    %v546 = vpack.c.b16 %v532, %v531
    %v547 = vpack.c.b16 %v534, %v533
    %v548 = vpack.c.b16 %v536, %v535
    %v549 = vpack.c.b16 %v538, %v537
    %v550 = vpack.c.b16 %v540, %v539
    %v551 = vpack.c.b16 %v542, %v541
    %v552 = vpack.c.b16 %v544, %v543
    %561 = vmatpush.bf16.msra.mxu0 %v552
    %562 = vmatpush.bf16.msra.mxu0 %v551
    %563 = vmatpush.bf16.msra.mxu0 %v550
    %564 = vmatpush.bf16.msra.mxu0 %v549
    %565 = vmatpush.bf16.msra.mxu0 %v548
    %566 = vmatpush.bf16.msra.mxu0 %v547
    %567 = vmatpush.bf16.msra.mxu0 %v546
    %568 = vmatpush.bf16.msra.mxu0 %v545
    %569 = vmatmul.bf16.gmra.mxu0 %v437
    %v570 = vpop.f32.mrf.mxu0
    %v571 = vadd.f32 %v496, %v570
    %v572 = vpop.f32.mrf.mxu0
    %573 = vdwg.mxu0
    %v575 = vperm.slane %v118, 0
    %v577 = vadd.f32 %v571, %v575
    %v578 = vmax.f32 %v577, 0.0
    %v579 = vpack.c.bf16 %v578, %v578
    %v580 = vld [vmem:[#allocation9] sm:$0xff]
    %v581 = vld [vmem:[#allocation9 + $0x8] sm:$0xff]
    %v582 = vld [vmem:[#allocation9 + $0x10] sm:$0xff]
    %v583 = vld [vmem:[#allocation9 + $0x18] sm:$0xff]
    %v584 = vld [vmem:[#allocation9 + $0x20] sm:$0xff]
    %v585 = vld [vmem:[#allocation9 + $0x28] sm:$0xff]
    %v586 = vld [vmem:[#allocation9 + $0x30] sm:$0xff]
    %v587 = vld [vmem:[#allocation9 + $0x38] sm:$0xff]
    %v588 = vld [vmem:[#allocation9 + $0x40] sm:$0xff]
    %v589 = vld [vmem:[#allocation9 + $0x48] sm:$0xff]
    %v590 = vld [vmem:[#allocation9 + $0x50] sm:$0xff]
    %v591 = vld [vmem:[#allocation9 + $0x58] sm:$0xff]
    %v592 = vld [vmem:[#allocation9 + $0x60] sm:$0xff]
    %v593 = vld [vmem:[#allocation9 + $0x68] sm:$0xff]
    %v594 = vld [vmem:[#allocation9 + $0x70] sm:$0xff]
    %v595 = vld [vmem:[#allocation9 + $0x78] sm:$0xff]
    %v597 = vperm.slane %v119, 0
    %v598 = vperm.slane %v119, 1
    %v617 = vunpack.c.l.b16 %v580
    %v618 = vunpack.c.h.b16 %v580
    %v619 = vunpack.c.l.b16 %v581
    %v620 = vunpack.c.h.b16 %v581
    %v621 = vunpack.c.l.b16 %v582
    %v622 = vunpack.c.h.b16 %v582
    %v623 = vunpack.c.l.b16 %v583
    %v624 = vunpack.c.h.b16 %v583
    %v625 = vunpack.c.l.b16 %v584
    %v626 = vunpack.c.h.b16 %v584
    %v627 = vunpack.c.l.b16 %v585
    %v628 = vunpack.c.h.b16 %v585
    %v629 = vunpack.c.l.b16 %v586
    %v630 = vunpack.c.h.b16 %v586
    %v631 = vunpack.c.l.b16 %v587
    %v632 = vunpack.c.h.b16 %v587
    %v633 = vunpack.c.l.b16 %v588
    %v634 = vunpack.c.h.b16 %v588
    %v635 = vunpack.c.l.b16 %v589
    %v636 = vunpack.c.h.b16 %v589
    %v637 = vunpack.c.l.b16 %v590
    %v638 = vunpack.c.h.b16 %v590
    %v639 = vunpack.c.l.b16 %v591
    %v640 = vunpack.c.h.b16 %v591
    %v641 = vunpack.c.l.b16 %v592
    %v642 = vunpack.c.h.b16 %v592
    %v643 = vunpack.c.l.b16 %v593
    %v644 = vunpack.c.h.b16 %v593
    %v645 = vunpack.c.l.b16 %v594
    %v646 = vunpack.c.h.b16 %v594
    %v647 = vunpack.c.l.b16 %v595
    %v648 = vunpack.c.h.b16 %v595
    %v649 = vpack.c.b16 %v619, %v617
    %v650 = vpack.c.b16 %v620, %v618
    %v651 = vpack.c.b16 %v623, %v621
    %v652 = vpack.c.b16 %v624, %v622
    %v653 = vpack.c.b16 %v627, %v625
    %v654 = vpack.c.b16 %v628, %v626
    %v655 = vpack.c.b16 %v631, %v629
    %v656 = vpack.c.b16 %v632, %v630
    %v657 = vpack.c.b16 %v635, %v633
    %v658 = vpack.c.b16 %v636, %v634
    %v659 = vpack.c.b16 %v639, %v637
    %v660 = vpack.c.b16 %v640, %v638
    %v661 = vpack.c.b16 %v643, %v641
    %v662 = vpack.c.b16 %v644, %v642
    %v663 = vpack.c.b16 %v647, %v645
    %v664 = vpack.c.b16 %v648, %v646
    %681 = vmatpush.bf16.msra.mxu0 %v663
    %682 = vmatpush.bf16.msra.mxu0 %v661
    %683 = vmatpush.bf16.msra.mxu0 %v659
    %684 = vmatpush.bf16.msra.mxu0 %v657
    %685 = vmatpush.bf16.msra.mxu0 %v655
    %686 = vmatpush.bf16.msra.mxu0 %v653
    %687 = vmatpush.bf16.msra.mxu0 %v651
    %688 = vmatpush.bf16.msra.mxu0 %v649
    %689 = vmatmul.bf16.gmra.mxu0 %v579
    %v690 = vpop.f32.mrf.mxu0
    %v691 = vadd.f32 %v597, %v690
    %v692 = vpop.f32.mrf.mxu0
    %693 = vdwg.mxu0
    %694 = vmatpush.bf16.msra.mxu0 %v664
    %695 = vmatpush.bf16.msra.mxu0 %v662
    %696 = vmatpush.bf16.msra.mxu0 %v660
    %697 = vmatpush.bf16.msra.mxu0 %v658
    %698 = vmatpush.bf16.msra.mxu0 %v656
    %699 = vmatpush.bf16.msra.mxu0 %v654
    %700 = vmatpush.bf16.msra.mxu0 %v652
    %701 = vmatpush.bf16.msra.mxu0 %v650
    %702 = vmatmul.bf16.gmra.mxu0 %v579
    %v703 = vpop.f32.mrf.mxu0
    %v704 = vadd.f32 %v598, %v703
    %v705 = vpop.f32.mrf.mxu0
    %706 = vdwg.mxu0
    %v707 = vlaneseq
    %v708 = vand.u32 %v707, 127
    %v709 = vadd.s32 %v708, 128
    %vm710 = vcmp.eq.s32.totalorder %v708, 144
    %vm711 = vcmp.eq.s32.totalorder %v709, 144
    %v712 = vxor.u32 %v691, 2147483648
    %v713 = vxor.u32 %v704, 2147483648
    %v714 = vmul.f32 %v712, 1.442695
    %v715 = vpow.pop %v714
    %v716 = vmul.f32 %v713, 1.442695
    %v717 = vpow.pop %v716
    %v718 = vadd.f32 %v715, 1.0
    %v719 = vadd.f32 %v717, 1.0
    %v720 = vrcp.pop %v718
    %v721 = vmul.f32 %v718, %v720
    %v722 = vsub.f32 1.0, %v721
    %v723 = vmul.f32 %v720, %v722
    %v724 = vadd.f32 %v720, %v723
    %vm725 = vweird.f32 %v718
    %vm726 = vweird.f32 %v720
    %vm727 = vmor %vm725, %vm726
    %v728 = vsel %vm727, %v720, %v724
    %v729 = vand.u32 2147483647, %v718
    %vm730 = vcmp.eq.f32.partialorder %v729, 8.507059e+37
    %v731 = vand.u32 %v718, 2147483648
    %v732 = vor.u32 1.1754944e-38, %v731
    %v733 = vsel %vm730, %v732, %v728
    %v734 = vmul.f32 1.0, %v733
    %v735 = vrcp.pop %v719
    %v736 = vmul.f32 %v719, %v735
    %v737 = vsub.f32 1.0, %v736
    %v738 = vmul.f32 %v735, %v737
    %v739 = vadd.f32 %v735, %v738
    %vm740 = vweird.f32 %v719
    %vm741 = vweird.f32 %v735
    %vm742 = vmor %vm740, %vm741
    %v743 = vsel %vm742, %v735, %v739
    %v744 = vand.u32 2147483647, %v719
    %vm745 = vcmp.eq.f32.partialorder %v744, 8.507059e+37
    %v746 = vand.u32 %v719, 2147483648
    %v747 = vor.u32 1.1754944e-38, %v746
    %v748 = vsel %vm745, %v747, %v743
    %v749 = vmul.f32 1.0, %v748
    %v750 = vsel %vm710, %v734, %v691
    %v751 = vsel %vm711, %v749, %v704
    %752 = vst [vmem:[%s6] sm:$0xff] %v750
    %753 = vst [vmem:[%s6 + $0x8] sm:$0xff] %v751
    // Predicated region
    $region50: #{heteronym_forward.1} parent=1 // pred_check
      _
    $region51: #{heteronym_forward.1} parent=1 // pred_check_branch
      %755 = sbr.rel (0) target = $region53
    $region52: #{heteronym_forward.1} parent=1 // pred_region
      _
    $region53: #{heteronym_forward.1} parent=1 // pred_fallthru
      _
    // Predicated region
    $region54: #{heteronym_forward.1} parent=1 // pred_check
      _
    $region55: #{heteronym_forward.1} parent=1 // pred_check_branch
      %757 = sbr.rel (0) target = $region57
    $region56: #{heteronym_forward.1} parent=1 // pred_region
      _
    $region57: #{heteronym_forward.1} parent=1 // pred_fallthru
      _
    %758 = vsyncpa [#allocation3], 1
    %759 = vsyncpa [#allocation7], 1
    %760 = vsyncpa [#allocation10], 1
    %761 = vsyncpa [#allocation4], 1

</llo_original>
